<compile_context>
chip_gen: v6e
topology: v6e:2x2x1
jax: 0.10.0
libtpu: 0.0.40
codegen_flags: <defaults>
</compile_context>

<pallas_src>
import jax
import jax.numpy as jnp
from jax.experimental import pallas as pl
from jax.experimental.pallas import tpu as pltpu


_LANE = 128          # TPU lane width (last-dim tile)
_SUBLANE_BF16 = 16   # bf16 sublane packing -> keep batch tiles 16-aligned
_TILE_B_MAX = 1024   # max batch rows per grid step


def _round_up(x, m):
    return (x + m - 1) // m * m


def _cdiv(a, b):
    return -(-a // b)


def _choose_batch_tiling(batch):
    """Pick (tile_b, b_pad, n_tiles):
       * each grid step holds up to _TILE_B_MAX rows (amortizes per-step overhead),
       * >=2 grid steps when batch >= 128 (v7x megacore sharding of the batch axis),
       * even split of the batch across tiles (small tail waste),
       * tile_b 16-aligned (bf16 output block sublane packing)."""
    n_tiles = _cdiv(batch, _TILE_B_MAX)
    if n_tiles < 2 and batch >= 128:
        n_tiles = 2
    n_tiles = max(n_tiles, 1)
    tile_b = _round_up(max(_cdiv(batch, n_tiles), 1), _SUBLANE_BF16)
    return tile_b, n_tiles * tile_b, n_tiles


def _mlp_kernel(x_ref, w1_ref, b1_ref, w2_ref, b2_ref, w3_ref, b3_ref, o_ref):
    """x -> Linear -> ReLU -> Linear -> ReLU -> Linear on one batch tile.

    Layer 1 is full f32 (tiny K=dim_in, keeps parity with the f32 PyTorch
    forward); layers 2/3 use bf16 MXU operands with f32 accumulation.
    Output is stored bf16 (halves HBM writeback of the lane-padded block).
    """
    h1 = jnp.dot(x_ref[...], w1_ref[...],
                 preferred_element_type=jnp.float32) + b1_ref[...]
    h1 = jnp.maximum(h1, 0.0)

    h2 = jnp.dot(h1.astype(jnp.bfloat16), w2_ref[...],
                 preferred_element_type=jnp.float32) + b2_ref[...]
    h2 = jnp.maximum(h2, 0.0)

    out = jnp.dot(h2.astype(jnp.bfloat16), w3_ref[...],
                  preferred_element_type=jnp.float32) + b3_ref[...]
    o_ref[...] = out.astype(o_ref.dtype)


def mlp_forward(x, params, d_out):
    """x: (B, dim_in) f32 (obs||goal already concatenated). Returns (B, d_out) f32."""
    B, dim_in = x.shape
    h1_dim = params["W1"].shape[1]
    h2_dim = params["W2"].shape[1]
    d_out_pad = params["W3"].shape[1]         # lane-padded output width (mult of 128)

    tile_b, b_pad, n_tiles = _choose_batch_tiling(B)
    if b_pad != B:
        x = jnp.pad(x, ((0, b_pad - B), (0, 0)))
    x = x.astype(jnp.float32)

    def batch_spec(d):
        return pl.BlockSpec((tile_b, d), lambda i: (i, 0))

    def resident(arr):
        # Constant index_map: block DMA'd once, stays resident across grid steps.
        return pl.BlockSpec(arr.shape, lambda i: (0, 0))

    flops = 2 * b_pad * (dim_in * h1_dim + h1_dim * h2_dim + h2_dim * d_out_pad)
    weight_bytes = sum(int(v.size) * v.dtype.itemsize for v in params.values())
    bytes_accessed = b_pad * dim_in * 4 + b_pad * d_out_pad * 2 + weight_bytes

    out = pl.pallas_call(
        _mlp_kernel,
        out_shape=jax.ShapeDtypeStruct((b_pad, d_out_pad), jnp.bfloat16),
        grid=(n_tiles,),
        in_specs=[
            batch_spec(dim_in),
            resident(params["W1"]),
            resident(params["b1"]),
            resident(params["W2"]),
            resident(params["b2"]),
            resident(params["W3"]),
            resident(params["b3"]),
        ],
        out_specs=batch_spec(d_out_pad),
        compiler_params=pltpu.CompilerParams(
            dimension_semantics=("parallel",),      # shards batch grid over TCs (v7x)
            vmem_limit_bytes=32 * 1024 * 1024,
        ),
        cost_estimate=pl.CostEstimate(
            flops=flops, transcendentals=0, bytes_accessed=bytes_accessed),
    )(x, params["W1"], params["b1"], params["W2"], params["b2"],
      params["W3"], params["b3"])

    # Slice off batch/lane padding, return f32 logits (PyTorch-facing interface).
    return out[:B, :d_out].astype(jnp.float32)


class IndependentDiscretizedStochasticGoalPolicyPallas:
    """JAX/Pallas re-implementation of the PyTorch module's forward pass.

    Default StateGoalNetwork config: Flatten embeddings, FCNetwork with ReLU,
    no horizon conditioning. dim_out = n_dims * granularity.
    """

    def __init__(self, obs_dim, goal_dim, n_dims, granularity,
                 layers=(512, 512), key=None):
        self.n_dims = n_dims
        self.granularity = granularity
        self.d_out = n_dims * granularity
        dim_in = obs_dim + goal_dim
        h1, h2 = layers
        d_out_pad = _round_up(self.d_out, _LANE)   # lane-dense output padding

        if key is None:
            key = jax.random.PRNGKey(0)
        k1, k1b, k2, k2b, k3, k3b = jax.random.split(key, 6)

        def linear_init(kw, kb, fan_in, shape_w, shape_b):
            # torch.nn.Linear default: W, b ~ U(-1/sqrt(fan_in), 1/sqrt(fan_in))
            bound = 1.0 / jnp.sqrt(float(fan_in))
            w = jax.random.uniform(kw, shape_w, jnp.float32, -bound, bound)
            b = jax.random.uniform(kb, shape_b, jnp.float32, -bound, bound)
            return w, b

        W1, b1 = linear_init(k1, k1b, dim_in, (dim_in, h1), (1, h1))
        W2, b2 = linear_init(k2, k2b, h1, (h1, h2), (1, h2))
        W3, b3 = linear_init(k3, k3b, h2, (h2, self.d_out), (1, self.d_out))

        # Zero-pad the last layer to a lane-dense width; wrapper slices back.
        W3p = jnp.zeros((h2, d_out_pad), jnp.float32).at[:, : self.d_out].set(W3)
        b3p = jnp.zeros((1, d_out_pad), jnp.float32).at[:, : self.d_out].set(b3)

        # Layer 1 kept f32 (parity with the f32 torch forward; tiny K so cheap);
        # layers 2/3 weights stored bf16 (MXU operands, half the DMA bytes).
        self.params = {
            "W1": W1,
            "b1": b1,
            "W2": W2.astype(jnp.bfloat16),
            "b2": b2,
            "W3": W3p.astype(jnp.bfloat16),
            "b3": b3p,
        }

    def forward(self, obs, goal, horizon=None):
        # TODO(synk): horizon/CBC conditioning path (max_horizon is not None) not
        # implemented; default StateGoalNetwork uses plain FCNetwork.
        obs = obs.reshape(obs.shape[0], -1).astype(jnp.float32)     # Flatten
        goal = goal.reshape(goal.shape[0], -1).astype(jnp.float32)  # Flatten
        x = jnp.concatenate([obs, goal], axis=1)                    # torch.cat
        return mlp_forward(x, self.params, self.d_out)


def _reference_forward(policy, obs, goal):
    """Pure-jnp reference mirroring the kernel's numerics (f32 layer 1,
    bf16 operands for layers 2/3, f32 accumulation, bf16 output rounding)."""
    p = policy.params
    f32 = lambda a: a.astype(jnp.float32)
    rb = lambda a: a.astype(jnp.bfloat16).astype(jnp.float32)  # bf16 round-trip
    x = jnp.concatenate([obs.reshape(obs.shape[0], -1),
                         goal.reshape(goal.shape[0], -1)], axis=1).astype(jnp.float32)
    h1 = jnp.maximum(x @ p["W1"] + p["b1"], 0.0)
    h2 = jnp.maximum(rb(h1) @ f32(p["W2"]) + p["b2"], 0.0)
    out = rb(h2) @ f32(p["W3"]) + p["b3"]
    out = rb(out)                                  # kernel writes bf16 logits
    return out[:, : policy.d_out]


if __name__ == "__main__":
    key = jax.random.PRNGKey(0)
    k_obs, k_goal, k_params, k_obs2, k_goal2, k_obs3, k_goal3 = jax.random.split(key, 7)

    # Small synthetic env: obs_dim=16, goal_dim=16, action space 2 dims x 4 bins.
    obs_dim, goal_dim = 16, 16
    n_dims, granularity = 2, 4
    d_out = n_dims * granularity

    policy = IndependentDiscretizedStochasticGoalPolicyPallas(
        obs_dim, goal_dim, n_dims, granularity, layers=(256, 256), key=k_params
    )

    # Case 1: tiny batch (B=2) -> single 16-row tile (batch padding path).
    B = 2
    obs = jax.random.normal(k_obs, (B, obs_dim), jnp.float32)
    goal = jax.random.normal(k_goal, (B, goal_dim), jnp.float32)
    logits = jax.block_until_ready(policy.forward(obs, goal))
    assert logits.shape == (B, d_out), logits.shape
    ref = _reference_forward(policy, obs, goal)
    assert jnp.allclose(logits, ref, atol=2e-2, rtol=2e-2), "mismatch vs reference (B=2)"

    # Case 2: non-multiple-of-16 batch -> pad + slice-back path.
    B2 = 10
    obs2 = jax.random.normal(k_obs2, (B2, obs_dim), jnp.float32)
    goal2 = jax.random.normal(k_goal2, (B2, goal_dim), jnp.float32)
    logits2 = jax.block_until_ready(policy.forward(obs2, goal2))
    assert logits2.shape == (B2, d_out), logits2.shape
    ref2 = _reference_forward(policy, obs2, goal2)
    assert jnp.allclose(logits2, ref2, atol=2e-2, rtol=2e-2), "mismatch vs reference (B=10)"

    # Case 3: larger batch (B=300) -> even split into 2 tiles of 160 rows
    # (exercises the multi-step "parallel" batch grid / megacore path).
    B3 = 300
    obs3 = jax.random.normal(k_obs3, (B3, obs_dim), jnp.float32)
    goal3 = jax.random.normal(k_goal3, (B3, goal_dim), jnp.float32)
    logits3 = jax.block_until_ready(policy.forward(obs3, goal3))
    assert logits3.shape == (B3, d_out), logits3.shape
    ref3 = _reference_forward(policy, obs3, goal3)
    assert jnp.allclose(logits3, ref3, atol=2e-2, rtol=2e-2), "mismatch vs reference (B=300)"

    print("KERNEL_OK")
</pallas_src>

<mosaic_0001>
module attributes {stable_mosaic.version = 11 : i64} {
  func.func @_mlp_kernel(%arg0: i32, %arg1: memref<16x32xf32, #tpu.memory_space<vmem>>, %arg2: memref<32x256xf32, #tpu.memory_space<vmem>>, %arg3: memref<1x256xf32, #tpu.memory_space<vmem>>, %arg4: memref<256x256xbf16, #tpu.memory_space<vmem>>, %arg5: memref<1x256xf32, #tpu.memory_space<vmem>>, %arg6: memref<256x128xbf16, #tpu.memory_space<vmem>>, %arg7: memref<1x128xf32, #tpu.memory_space<vmem>>, %arg8: memref<16x128xbf16, #tpu.memory_space<vmem>>) attributes {dimension_semantics = [#tpu.dimension_semantics<parallel>], iteration_bounds = array<i64: 1>, scalar_prefetch = 0 : i64, scratch_operands = 0 : i64, tpu.core_type = #tpu.core_type<tc>, window_params = [{transform_indices = @transform_0, window_bounds = array<i64: 16, 32>}, {pipeline_mode = #tpu.pipeline_mode<synchronous>, transform_indices = @transform_1, window_bounds = array<i64: 32, 256>}, {pipeline_mode = #tpu.pipeline_mode<synchronous>, transform_indices = @transform_2, window_bounds = array<i64: 1, 256>}, {pipeline_mode = #tpu.pipeline_mode<synchronous>, transform_indices = @transform_3, window_bounds = array<i64: 256, 256>}, {pipeline_mode = #tpu.pipeline_mode<synchronous>, transform_indices = @transform_4, window_bounds = array<i64: 1, 256>}, {pipeline_mode = #tpu.pipeline_mode<synchronous>, transform_indices = @transform_5, window_bounds = array<i64: 256, 128>}, {pipeline_mode = #tpu.pipeline_mode<synchronous>, transform_indices = @transform_6, window_bounds = array<i64: 1, 128>}, {transform_indices = @transform_7, window_bounds = array<i64: 16, 128>}]} {
    %c0 = arith.constant 0 : index
    %c0_0 = arith.constant 0 : index
    %0 = vector.load %arg1[%c0, %c0_0] : memref<16x32xf32, #tpu.memory_space<vmem>>, vector<16x32xf32>
    %c0_1 = arith.constant 0 : index
    %c0_2 = arith.constant 0 : index
    %1 = vector.load %arg2[%c0_1, %c0_2] : memref<32x256xf32, #tpu.memory_space<vmem>>, vector<32x256xf32>
    %cst = arith.constant dense<0.000000e+00> : vector<16x256xf32>
    %2 = tpu.matmul %0, %1, %cst {dimension_numbers = #tpu.dot_dimension_numbers<[1], [0], [0], [1], [0, 0, 1, 1], [], []>} : vector<16x32xf32>, vector<32x256xf32>, vector<16x256xf32> -> vector<16x256xf32>
    %c0_3 = arith.constant 0 : index
    %c0_4 = arith.constant 0 : index
    %3 = vector.load %arg3[%c0_3, %c0_4] : memref<1x256xf32, #tpu.memory_space<vmem>>, vector<1x256xf32>
    %4 = vector.broadcast %3 : vector<1x256xf32> to vector<16x256xf32>
    %5 = arith.addf %2, %4 : vector<16x256xf32>
    %cst_5 = arith.constant 0.000000e+00 : f32
    %6 = vector.broadcast %cst_5 : f32 to vector<16x256xf32>
    %7 = arith.maximumf %5, %6 : vector<16x256xf32>
    %8 = arith.truncf %7 : vector<16x256xf32> to vector<16x256xbf16>
    %c0_6 = arith.constant 0 : index
    %c0_7 = arith.constant 0 : index
    %9 = vector.load %arg4[%c0_6, %c0_7] : memref<256x256xbf16, #tpu.memory_space<vmem>>, vector<256x256xbf16>
    %cst_8 = arith.constant dense<0.000000e+00> : vector<16x256xf32>
    %10 = tpu.matmul %8, %9, %cst_8 {dimension_numbers = #tpu.dot_dimension_numbers<[1], [0], [0], [1], [0, 0, 1, 1], [], []>} : vector<16x256xbf16>, vector<256x256xbf16>, vector<16x256xf32> -> vector<16x256xf32>
    %c0_9 = arith.constant 0 : index
    %c0_10 = arith.constant 0 : index
    %11 = vector.load %arg5[%c0_9, %c0_10] : memref<1x256xf32, #tpu.memory_space<vmem>>, vector<1x256xf32>
    %12 = vector.broadcast %11 : vector<1x256xf32> to vector<16x256xf32>
    %13 = arith.addf %10, %12 : vector<16x256xf32>
    %cst_11 = arith.constant 0.000000e+00 : f32
    %14 = vector.broadcast %cst_11 : f32 to vector<16x256xf32>
    %15 = arith.maximumf %13, %14 : vector<16x256xf32>
    %16 = arith.truncf %15 : vector<16x256xf32> to vector<16x256xbf16>
    %c0_12 = arith.constant 0 : index
    %c0_13 = arith.constant 0 : index
    %17 = vector.load %arg6[%c0_12, %c0_13] : memref<256x128xbf16, #tpu.memory_space<vmem>>, vector<256x128xbf16>
    %cst_14 = arith.constant dense<0.000000e+00> : vector<16x128xf32>
    %18 = tpu.matmul %16, %17, %cst_14 {dimension_numbers = #tpu.dot_dimension_numbers<[1], [0], [0], [1], [0, 0, 1, 1], [], []>} : vector<16x256xbf16>, vector<256x128xbf16>, vector<16x128xf32> -> vector<16x128xf32>
    %c0_15 = arith.constant 0 : index
    %c0_16 = arith.constant 0 : index
    %19 = vector.load %arg7[%c0_15, %c0_16] : memref<1x128xf32, #tpu.memory_space<vmem>>, vector<1x128xf32>
    %20 = vector.broadcast %19 : vector<1x128xf32> to vector<16x128xf32>
    %21 = arith.addf %18, %20 : vector<16x128xf32>
    %22 = arith.truncf %21 : vector<16x128xf32> to vector<16x128xbf16>
    %c0_17 = arith.constant 0 : index
    %c0_18 = arith.constant 0 : index
    %23 = vector.load %arg8[%c0_17, %c0_18] : memref<16x128xbf16, #tpu.memory_space<vmem>>, vector<16x128xbf16>
    tpu.vector_store %arg8[%c0_17, %c0_18], %22 {strides = array<i32>} : memref<16x128xbf16, #tpu.memory_space<vmem>>, vector<16x128xbf16>,
    return
  }
  func.func @transform_0(%arg0: i32) -> (i32, i32) {
    %c0_i32 = arith.constant 0 : i32
    %c0_i32_0 = arith.constant 0 : i32
    return %arg0, %c0_i32 : i32, i32
  }
  func.func @transform_1(%arg0: i32) -> (i32, i32) {
    %c0_i32 = arith.constant 0 : i32
    %c0_i32_0 = arith.constant 0 : i32
    %c0_i32_1 = arith.constant 0 : i32
    return %c0_i32, %c0_i32_0 : i32, i32
  }
  func.func @transform_2(%arg0: i32) -> (i32, i32) {
    %c0_i32 = arith.constant 0 : i32
    %c0_i32_0 = arith.constant 0 : i32
    %c0_i32_1 = arith.constant 0 : i32
    return %c0_i32, %c0_i32_0 : i32, i32
  }
  func.func @transform_3(%arg0: i32) -> (i32, i32) {
    %c0_i32 = arith.constant 0 : i32
    %c0_i32_0 = arith.constant 0 : i32
    %c0_i32_1 = arith.constant 0 : i32
    return %c0_i32, %c0_i32_0 : i32, i32
  }
  func.func @transform_4(%arg0: i32) -> (i32, i32) {
    %c0_i32 = arith.constant 0 : i32
    %c0_i32_0 = arith.constant 0 : i32
    %c0_i32_1 = arith.constant 0 : i32
    return %c0_i32, %c0_i32_0 : i32, i32
  }
  func.func @transform_5(%arg0: i32) -> (i32, i32) {
    %c0_i32 = arith.constant 0 : i32
    %c0_i32_0 = arith.constant 0 : i32
    %c0_i32_1 = arith.constant 0 : i32
    return %c0_i32, %c0_i32_0 : i32, i32
  }
  func.func @transform_6(%arg0: i32) -> (i32, i32) {
    %c0_i32 = arith.constant 0 : i32
    %c0_i32_0 = arith.constant 0 : i32
    %c0_i32_1 = arith.constant 0 : i32
    return %c0_i32, %c0_i32_0 : i32, i32
  }
  func.func @transform_7(%arg0: i32) -> (i32, i32) {
    %c0_i32 = arith.constant 0 : i32
    %c0_i32_0 = arith.constant 0 : i32
    return %arg0, %c0_i32 : i32, i32
  }
}

</mosaic_0001>

<llo_original>
// kernel: tpu_custom_call.1
$region0: #{tpu_custom_call.1}
  #allocation0 [shape = 'u32[]', space=smem, size = 0x4, offset = 0x4, fixed_abs, tag = 'smem constant byte address 0x4 - core index']
  #allocation1 [shape = 'u32[144,128]{1,0:T(1,128)}', space=vmem, size = 0x12000, scoped, tag = 'internal scratch']
  %s0 = inlined_call_operand.hbm [shape: f32[16,32], index: 0, kind: input, shape index: {}]
  %s1 = inlined_call_operand.hbm [shape: f32[32,256], index: 1, kind: input, shape index: {}]
  %s2 = inlined_call_operand.vmem [shape: f32[1,256], index: 2, kind: input, shape index: {}]
  %s3 = inlined_call_operand.hbm [shape: bf16[256,256], index: 3, kind: input, shape index: {}]
  %s4 = inlined_call_operand.vmem [shape: f32[1,256], index: 4, kind: input, shape index: {}]
  %s5 = inlined_call_operand.hbm [shape: bf16[256,128], index: 5, kind: input, shape index: {}]
  %s6 = inlined_call_operand.vmem [shape: f32[1,128], index: 6, kind: input, shape index: {}]
  %s7 = inlined_call_operand.hbm [shape: bf16[16,128], index: 7, kind: output, shape index: {}]
  %s8 = sld [smem:[#allocation0]]
  $region54: #{tpu_custom_call.1} parent=0
    _
  %s10 = ssub.s32 1, %s8
  %s11 = scalar_select 0, %s10, %s8
  $region1: #{tpu_custom_call.1} parent=0
    #allocation2 [shape = 'u8[8192]{0}', space=vmem, size = 0x2000, scoped, tag = 'input window, operand 0, single buffered']
    #allocation3 [shape = 's32[1]{0}', space=sflag, size = 0x4, scoped, tag = 'scoped memory for tpu_custom_call.1']
    #allocation4 [shape = 's32[1]{0}', space=sflag, size = 0x4, scoped, tag = 'scoped memory for tpu_custom_call.1']
    #allocation5 [shape = 'u8[32768]{0}', space=vmem, size = 0x8000, scoped, tag = 'input window, operand 1, single buffered']
    #allocation6 [shape = 's32[1]{0}', space=sflag, size = 0x4, scoped, tag = 'scoped memory for tpu_custom_call.1']
    #allocation7 [shape = 'u8[131072]{0}', space=vmem, size = 0x20000, scoped, tag = 'input window, operand 3, single buffered']
    #allocation8 [shape = 'u8[65536]{0}', space=vmem, size = 0x10000, scoped, tag = 'input window, operand 5, single buffered']
    #allocation9 [shape = 's32[1]{0}', space=sflag, size = 0x4, scoped, tag = 'scoped memory for tpu_custom_call.1']
    #allocation10 [shape = 'u8[4096]{0}', space=vmem, size = 0x1000, scoped, tag = 'output window, operand 0, single buffered']
    %12 = vsyncpa [#allocation3], 0
    %13 = vsyncpa [#allocation6], 0
    %14 = vsyncpa [#allocation9], 0
    %15 = vsyncpa [#allocation4], 0
    // Predicated region
    $region2: #{tpu_custom_call.1} parent=1 // pred_check
      _
    $region3: #{tpu_custom_call.1} parent=1 // pred_check_branch
      %17 = sbr.rel (0) target = $region5
    $region4: #{tpu_custom_call.1} parent=1 // pred_region
      %s19 = ssub.s32 256, 256
      %20 = vsyncadd [#allocation3], %s19
      %s21 = sshll.u32 [#allocation2], 4
      %s22 = int_to_ptr.vmem [resolvable:$true] %s21
      %27 = dma.hbm_to_vmem [thread:$0]  %s0, 256, %s22, [#allocation3], 128, 128, 8
    $region5: #{tpu_custom_call.1} parent=1 // pred_fallthru
      _
    // Predicated region
    $region6: #{tpu_custom_call.1} parent=1 // pred_check
      _
    $region7: #{tpu_custom_call.1} parent=1 // pred_check_branch
      %29 = sbr.rel (0) target = $region9
    $region8: #{tpu_custom_call.1} parent=1 // pred_region
      %s31 = ssub.s32 1024, 1024
      %32 = vsyncadd [#allocation6], %s31
      %s33 = sshll.u32 [#allocation5], 4
      %s34 = int_to_ptr.vmem [resolvable:$true] %s33
      %39 = dma.hbm_to_vmem [thread:$0]  %s1, 1024, %s34, [#allocation6], 256, 256, 16
    $region9: #{tpu_custom_call.1} parent=1 // pred_fallthru
      _
    // Predicated region
    $region10: #{tpu_custom_call.1} parent=1 // pred_check
      _
    $region11: #{tpu_custom_call.1} parent=1 // pred_check_branch
      %41 = sbr.rel (0) target = $region13
    $region12: #{tpu_custom_call.1} parent=1 // pred_region
      _
    $region13: #{tpu_custom_call.1} parent=1 // pred_fallthru
      _
    // Predicated region
    $region14: #{tpu_custom_call.1} parent=1 // pred_check
      _
    $region15: #{tpu_custom_call.1} parent=1 // pred_check_branch
      %43 = sbr.rel (0) target = $region17
    $region16: #{tpu_custom_call.1} parent=1 // pred_region
      %s45 = ssub.s32 4096, 4096
      %46 = vsyncadd [#allocation6], %s45
      %s47 = sshll.u32 [#allocation7], 4
      %s48 = int_to_ptr.vmem [resolvable:$true] %s47
      %53 = dma.hbm_to_vmem [thread:$0]  %s3, 4096, %s48, [#allocation6], 128, 128, 8
    $region17: #{tpu_custom_call.1} parent=1 // pred_fallthru
      _
    // Predicated region
    $region18: #{tpu_custom_call.1} parent=1 // pred_check
      _
    $region19: #{tpu_custom_call.1} parent=1 // pred_check_branch
      %55 = sbr.rel (0) target = $region21
    $region20: #{tpu_custom_call.1} parent=1 // pred_region
      _
    $region21: #{tpu_custom_call.1} parent=1 // pred_fallthru
      _
    // Predicated region
    $region22: #{tpu_custom_call.1} parent=1 // pred_check
      _
    $region23: #{tpu_custom_call.1} parent=1 // pred_check_branch
      %57 = sbr.rel (0) target = $region25
    $region24: #{tpu_custom_call.1} parent=1 // pred_region
      %s59 = ssub.s32 2048, 2048
      %60 = vsyncadd [#allocation9], %s59
      %s61 = sshll.u32 [#allocation8], 4
      %s62 = int_to_ptr.vmem [resolvable:$true] %s61
      %67 = dma.hbm_to_vmem [thread:$0]  %s5, 2048, %s62, [#allocation9], 64, 64, 4
    $region25: #{tpu_custom_call.1} parent=1 // pred_fallthru
      _
    // Predicated region
    $region26: #{tpu_custom_call.1} parent=1 // pred_check
      _
    $region27: #{tpu_custom_call.1} parent=1 // pred_check_branch
      %69 = sbr.rel (0) target = $region29
    $region28: #{tpu_custom_call.1} parent=1 // pred_region
      _
    $region29: #{tpu_custom_call.1} parent=1 // pred_fallthru
      _
    // Predicated region
    $region30: #{tpu_custom_call.1} parent=1 // pred_check
      _
    $region31: #{tpu_custom_call.1} parent=1 // pred_check_branch
      %71 = sbr.rel (0) target = $region33
    $region32: #{tpu_custom_call.1} parent=1 // pred_region
      %72 = dma.done [#allocation3], 256
    $region33: #{tpu_custom_call.1} parent=1 // pred_fallthru
      _
    // Predicated region
    $region34: #{tpu_custom_call.1} parent=1 // pred_check
      _
    $region35: #{tpu_custom_call.1} parent=1 // pred_check_branch
      %74 = sbr.rel (0) target = $region37
    $region36: #{tpu_custom_call.1} parent=1 // pred_region
      %75 = dma.done [#allocation6], 1024
    $region37: #{tpu_custom_call.1} parent=1 // pred_fallthru
      _
    // Predicated region
    $region38: #{tpu_custom_call.1} parent=1 // pred_check
      _
    $region39: #{tpu_custom_call.1} parent=1 // pred_check_branch
      %77 = sbr.rel (0) target = $region41
    $region40: #{tpu_custom_call.1} parent=1 // pred_region
      %78 = dma.done [#allocation6], 4096
    $region41: #{tpu_custom_call.1} parent=1 // pred_fallthru
      _
    // Predicated region
    $region42: #{tpu_custom_call.1} parent=1 // pred_check
      _
    $region43: #{tpu_custom_call.1} parent=1 // pred_check_branch
      %80 = sbr.rel (0) target = $region45
    $region44: #{tpu_custom_call.1} parent=1 // pred_region
      %81 = dma.done [#allocation9], 2048
    $region45: #{tpu_custom_call.1} parent=1 // pred_fallthru
      _
    %v83 = vld [vmem:[#allocation2] sm:$0xff]
    %v84 = vld [vmem:[#allocation2 + $0x8] sm:$0xff]
    %v85 = vld [vmem:[#allocation5] sm:$0xff]
    %v86 = vld [vmem:[#allocation5 + $0x8] sm:$0xff]
    %v87 = vld [vmem:[#allocation5 + $0x10] sm:$0xff]
    %v88 = vld [vmem:[#allocation5 + $0x18] sm:$0xff]
    %v89 = vld [vmem:[#allocation5 + $0x20] sm:$0xff]
    %v90 = vld [vmem:[#allocation5 + $0x28] sm:$0xff]
    %v91 = vld [vmem:[#allocation5 + $0x30] sm:$0xff]
    %v92 = vld [vmem:[#allocation5 + $0x38] sm:$0xff]
    %v93 = vld [vmem:[%s2] sm:$0x3]
    %v95 = vlaneseq
    %v96 = vshrl.u32 %v95, 7
    %v97 = vsub.s32 0, %v96
    %v98 = vrot.slane %v93, %v97
    %v99 = vlaneseq
    %v100 = vshrl.u32 %v99, 7
    %v101 = vsub.s32 1, %v100
    %v102 = vrot.slane %v93, %v101
    %vm105 = vcmask 261120
    %v107 = vsel %vm105, %v83, 0
    %v110 = vsel %vm105, %v84, 0
    %112 = vmatprep.subr.mxu0 0.0
    %113 = vmatpush1.msra.mxu0 0.0
    %114 = vmatprep.subr.mxu0 0.0
    %115 = vmatpush1.msra.mxu0 0.0
    %116 = vmatprep.subr.mxu0 0.0
    %117 = vmatpush1.msra.mxu0 0.0
    %118 = vmatprep.subr.mxu0 0.0
    %119 = vmatpush1.msra.mxu0 0.0
    %120 = vmatprep.subr.mxu0 0.0
    %121 = vmatpush1.msra.mxu0 0.0
    %122 = vmatprep.subr.mxu0 0.0
    %123 = vmatpush1.msra.mxu0 0.0
    %124 = vmatprep.subr.mxu0 0.0
    %125 = vmatpush1.msra.mxu0 0.0
    %126 = vmatprep.subr.mxu0 0.0
    %127 = vmatpush1.msra.mxu0 0.0
    %128 = vmatprep.subr.mxu0 0.0
    %129 = vmatpush1.msra.mxu0 0.0
    %130 = vmatprep.subr.mxu0 0.0
    %131 = vmatpush1.msra.mxu0 0.0
    %132 = vmatprep.subr.mxu0 0.0
    %133 = vmatpush1.msra.mxu0 0.0
    %134 = vmatprep.subr.mxu0 0.0
    %135 = vmatpush1.msra.mxu0 0.0
    %136 = vmatprep.subr.mxu0 %v92
    %137 = vmatpush1.msra.mxu0 %v91
    %138 = vmatprep.subr.mxu0 %v90
    %139 = vmatpush1.msra.mxu0 %v89
    %140 = vmatprep.subr.mxu0 %v88
    %141 = vmatpush1.msra.mxu0 %v87
    %142 = vmatprep.subr.mxu0 %v86
    %143 = vmatpush1.msra.mxu0 %v85
    %144 = vmatprep.subr.mxu0 0.0
    %145 = vmatpush2.msra.mxu0 0.0
    %146 = vmatprep.subr.mxu0 0.0
    %147 = vmatpush2.msra.mxu0 0.0
    %148 = vmatprep.subr.mxu0 0.0
    %149 = vmatpush2.msra.mxu0 0.0
    %150 = vmatprep.subr.mxu0 0.0
    %151 = vmatpush2.msra.mxu0 0.0
    %152 = vmatprep.subr.mxu0 0.0
    %153 = vmatpush2.msra.mxu0 0.0
    %154 = vmatprep.subr.mxu0 0.0
    %155 = vmatpush2.msra.mxu0 0.0
    %156 = vmatprep.subr.mxu0 0.0
    %157 = vmatpush2.msra.mxu0 0.0
    %158 = vmatprep.subr.mxu0 0.0
    %159 = vmatpush2.msra.mxu0 0.0
    %160 = vmatprep.subr.mxu0 0.0
    %161 = vmatpush2.msra.mxu0 0.0
    %162 = vmatprep.subr.mxu0 0.0
    %163 = vmatpush2.msra.mxu0 0.0
    %164 = vmatprep.subr.mxu0 0.0
    %165 = vmatpush2.msra.mxu0 0.0
    %166 = vmatprep.subr.mxu0 0.0
    %167 = vmatpush2.msra.mxu0 0.0
    %168 = vmatprep.subr.mxu0 0.0
    %169 = vmatpush2.msra.mxu0 0.0
    %170 = vmatprep.subr.mxu0 0.0
    %171 = vmatpush2.msra.mxu0 0.0
    %172 = vmatprep.subr.mxu0 0.0
    %173 = vmatpush2.msra.mxu0 0.0
    %174 = vmatprep.subr.mxu0 0.0
    %175 = vmatpush2.msra.mxu0 0.0
    %176 = vmatprep.mubr.f32.mxu0 0.0
    %177 = vmatmul.mubr.f32.gmra.mxu0 %v107
    %v178 = vpop.f32.mrf.mxu0
    %v179 = vadd.f32 %v98, %v178
    %v180 = vpop.f32.mrf.mxu0
    %v181 = vadd.f32 %v102, %v180
    %182 = vmatprep.mubr.f32.mxu0 0.0
    %183 = vmatmul.mubr.f32.gmra.mxu0 %v110
    %v184 = vpop.f32.mrf.mxu0
    %v185 = vadd.f32 %v98, %v184
    %v186 = vpop.f32.mrf.mxu0
    %v187 = vadd.f32 %v102, %v186
    %188 = vdwg.mxu0
    %v189 = vmax.f32 %v179, 0.0
    %v190 = vmax.f32 %v181, 0.0
    %v191 = vmax.f32 %v185, 0.0
    %v192 = vmax.f32 %v187, 0.0
    %v193 = vpack.c.bf16 %v191, %v189
    %v194 = vpack.c.bf16 %v192, %v190
    %v195 = vld [vmem:[#allocation7] sm:$0xff]
    %v196 = vld [vmem:[#allocation7 + $0x8] sm:$0xff]
    %v197 = vld [vmem:[#allocation7 + $0x10] sm:$0xff]
    %v198 = vld [vmem:[#allocation7 + $0x18] sm:$0xff]
    %v199 = vld [vmem:[#allocation7 + $0x20] sm:$0xff]
    %v200 = vld [vmem:[#allocation7 + $0x28] sm:$0xff]
    %v201 = vld [vmem:[#allocation7 + $0x30] sm:$0xff]
    %v202 = vld [vmem:[#allocation7 + $0x38] sm:$0xff]
    %v203 = vld [vmem:[#allocation7 + $0x40] sm:$0xff]
    %v204 = vld [vmem:[#allocation7 + $0x48] sm:$0xff]
    %v205 = vld [vmem:[#allocation7 + $0x50] sm:$0xff]
    %v206 = vld [vmem:[#allocation7 + $0x58] sm:$0xff]
    %v207 = vld [vmem:[#allocation7 + $0x60] sm:$0xff]
    %v208 = vld [vmem:[#allocation7 + $0x68] sm:$0xff]
    %v209 = vld [vmem:[#allocation7 + $0x70] sm:$0xff]
    %v210 = vld [vmem:[#allocation7 + $0x78] sm:$0xff]
    %v211 = vld [vmem:[#allocation7 + $0x80] sm:$0xff]
    %v212 = vld [vmem:[#allocation7 + $0x88] sm:$0xff]
    %v213 = vld [vmem:[#allocation7 + $0x90] sm:$0xff]
    %v214 = vld [vmem:[#allocation7 + $0x98] sm:$0xff]
    %v215 = vld [vmem:[#allocation7 + $0xa0] sm:$0xff]
    %v216 = vld [vmem:[#allocation7 + $0xa8] sm:$0xff]
    %v217 = vld [vmem:[#allocation7 + $0xb0] sm:$0xff]
    %v218 = vld [vmem:[#allocation7 + $0xb8] sm:$0xff]
    %v219 = vld [vmem:[#allocation7 + $0xc0] sm:$0xff]
    %v220 = vld [vmem:[#allocation7 + $0xc8] sm:$0xff]
    %v221 = vld [vmem:[#allocation7 + $0xd0] sm:$0xff]
    %v222 = vld [vmem:[#allocation7 + $0xd8] sm:$0xff]
    %v223 = vld [vmem:[#allocation7 + $0xe0] sm:$0xff]
    %v224 = vld [vmem:[#allocation7 + $0xe8] sm:$0xff]
    %v225 = vld [vmem:[#allocation7 + $0xf0] sm:$0xff]
    %v226 = vld [vmem:[#allocation7 + $0xf8] sm:$0xff]
    %v227 = vld [vmem:[%s4] sm:$0x3]
    %v229 = vlaneseq
    %v230 = vshrl.u32 %v229, 7
    %v231 = vsub.s32 0, %v230
    %v232 = vrot.slane %v227, %v231
    %v233 = vlaneseq
    %v234 = vshrl.u32 %v233, 7
    %v235 = vsub.s32 1, %v234
    %v236 = vrot.slane %v227, %v235
    %v271 = vunpack.c.l.b16 %v195
    %v272 = vunpack.c.h.b16 %v195
    %v273 = vunpack.c.l.b16 %v196
    %v274 = vunpack.c.h.b16 %v196
    %v275 = vunpack.c.l.b16 %v197
    %v276 = vunpack.c.h.b16 %v197
    %v277 = vunpack.c.l.b16 %v198
    %v278 = vunpack.c.h.b16 %v198
    %v279 = vunpack.c.l.b16 %v199
    %v280 = vunpack.c.h.b16 %v199
    %v281 = vunpack.c.l.b16 %v200
    %v282 = vunpack.c.h.b16 %v200
    %v283 = vunpack.c.l.b16 %v201
    %v284 = vunpack.c.h.b16 %v201
    %v285 = vunpack.c.l.b16 %v202
    %v286 = vunpack.c.h.b16 %v202
    %v287 = vunpack.c.l.b16 %v203
    %v288 = vunpack.c.h.b16 %v203
    %v289 = vunpack.c.l.b16 %v204
    %v290 = vunpack.c.h.b16 %v204
    %v291 = vunpack.c.l.b16 %v205
    %v292 = vunpack.c.h.b16 %v205
    %v293 = vunpack.c.l.b16 %v206
    %v294 = vunpack.c.h.b16 %v206
    %v295 = vunpack.c.l.b16 %v207
    %v296 = vunpack.c.h.b16 %v207
    %v297 = vunpack.c.l.b16 %v208
    %v298 = vunpack.c.h.b16 %v208
    %v299 = vunpack.c.l.b16 %v209
    %v300 = vunpack.c.h.b16 %v209
    %v301 = vunpack.c.l.b16 %v210
    %v302 = vunpack.c.h.b16 %v210
    %v303 = vunpack.c.l.b16 %v211
    %v304 = vunpack.c.h.b16 %v211
    %v305 = vunpack.c.l.b16 %v212
    %v306 = vunpack.c.h.b16 %v212
    %v307 = vunpack.c.l.b16 %v213
    %v308 = vunpack.c.h.b16 %v213
    %v309 = vunpack.c.l.b16 %v214
    %v310 = vunpack.c.h.b16 %v214
    %v311 = vunpack.c.l.b16 %v215
    %v312 = vunpack.c.h.b16 %v215
    %v313 = vunpack.c.l.b16 %v216
    %v314 = vunpack.c.h.b16 %v216
    %v315 = vunpack.c.l.b16 %v217
    %v316 = vunpack.c.h.b16 %v217
    %v317 = vunpack.c.l.b16 %v218
    %v318 = vunpack.c.h.b16 %v218
    %v319 = vunpack.c.l.b16 %v219
    %v320 = vunpack.c.h.b16 %v219
    %v321 = vunpack.c.l.b16 %v220
    %v322 = vunpack.c.h.b16 %v220
    %v323 = vunpack.c.l.b16 %v221
    %v324 = vunpack.c.h.b16 %v221
    %v325 = vunpack.c.l.b16 %v222
    %v326 = vunpack.c.h.b16 %v222
    %v327 = vunpack.c.l.b16 %v223
    %v328 = vunpack.c.h.b16 %v223
    %v329 = vunpack.c.l.b16 %v224
    %v330 = vunpack.c.h.b16 %v224
    %v331 = vunpack.c.l.b16 %v225
    %v332 = vunpack.c.h.b16 %v225
    %v333 = vunpack.c.l.b16 %v226
    %v334 = vunpack.c.h.b16 %v226
    %v335 = vpack.c.b16 %v273, %v271
    %v336 = vpack.c.b16 %v274, %v272
    %v337 = vpack.c.b16 %v277, %v275
    %v338 = vpack.c.b16 %v278, %v276
    %v339 = vpack.c.b16 %v281, %v279
    %v340 = vpack.c.b16 %v282, %v280
    %v341 = vpack.c.b16 %v285, %v283
    %v342 = vpack.c.b16 %v286, %v284
    %v343 = vpack.c.b16 %v289, %v287
    %v344 = vpack.c.b16 %v290, %v288
    %v345 = vpack.c.b16 %v293, %v291
    %v346 = vpack.c.b16 %v294, %v292
    %v347 = vpack.c.b16 %v297, %v295
    %v348 = vpack.c.b16 %v298, %v296
    %v349 = vpack.c.b16 %v301, %v299
    %v350 = vpack.c.b16 %v302, %v300
    %v351 = vpack.c.b16 %v305, %v303
    %v352 = vpack.c.b16 %v306, %v304
    %v353 = vpack.c.b16 %v309, %v307
    %v354 = vpack.c.b16 %v310, %v308
    %v355 = vpack.c.b16 %v313, %v311
    %v356 = vpack.c.b16 %v314, %v312
    %v357 = vpack.c.b16 %v317, %v315
    %v358 = vpack.c.b16 %v318, %v316
    %v359 = vpack.c.b16 %v321, %v319
    %v360 = vpack.c.b16 %v322, %v320
    %v361 = vpack.c.b16 %v325, %v323
    %v362 = vpack.c.b16 %v326, %v324
    %v363 = vpack.c.b16 %v329, %v327
    %v364 = vpack.c.b16 %v330, %v328
    %v365 = vpack.c.b16 %v333, %v331
    %v366 = vpack.c.b16 %v334, %v332
    %399 = vmatprep.subr.bf16.mxu0 %v350
    %400 = vmatpush1.bf16.msra.mxu0 %v349
    %401 = vmatprep.subr.bf16.mxu0 %v348
    %402 = vmatpush1.bf16.msra.mxu0 %v347
    %403 = vmatprep.subr.bf16.mxu0 %v346
    %404 = vmatpush1.bf16.msra.mxu0 %v345
    %405 = vmatprep.subr.bf16.mxu0 %v344
    %406 = vmatpush1.bf16.msra.mxu0 %v343
    %407 = vmatprep.subr.bf16.mxu0 %v342
    %408 = vmatpush1.bf16.msra.mxu0 %v341
    %409 = vmatprep.subr.bf16.mxu0 %v340
    %410 = vmatpush1.bf16.msra.mxu0 %v339
    %411 = vmatprep.subr.bf16.mxu0 %v338
    %412 = vmatpush1.bf16.msra.mxu0 %v337
    %413 = vmatprep.subr.bf16.mxu0 %v336
    %414 = vmatpush1.bf16.msra.mxu0 %v335
    %415 = vmatprep.subr.bf16.mxu0 %v366
    %416 = vmatpush2.bf16.msra.mxu0 %v365
    %417 = vmatprep.subr.bf16.mxu0 %v364
    %418 = vmatpush2.bf16.msra.mxu0 %v363
    %419 = vmatprep.subr.bf16.mxu0 %v362
    %420 = vmatpush2.bf16.msra.mxu0 %v361
    %421 = vmatprep.subr.bf16.mxu0 %v360
    %422 = vmatpush2.bf16.msra.mxu0 %v359
    %423 = vmatprep.subr.bf16.mxu0 %v358
    %424 = vmatpush2.bf16.msra.mxu0 %v357
    %425 = vmatprep.subr.bf16.mxu0 %v356
    %426 = vmatpush2.bf16.msra.mxu0 %v355
    %427 = vmatprep.subr.bf16.mxu0 %v354
    %428 = vmatpush2.bf16.msra.mxu0 %v353
    %429 = vmatprep.subr.bf16.mxu0 %v352
    %430 = vmatpush2.bf16.msra.mxu0 %v351
    %431 = vmatprep.mubr.bf16.mxu0 %v194
    %432 = vmatmul.mubr.bf16.gmra.mxu0 %v193
    %v433 = vpop.f32.mrf.mxu0
    %v434 = vadd.f32 %v232, %v433
    %v435 = vpop.f32.mrf.mxu0
    %v436 = vadd.f32 %v236, %v435
    %v437 = vpop.f32.mrf.mxu0
    %v438 = vadd.f32 %v232, %v437
    %v439 = vpop.f32.mrf.mxu0
    %v440 = vadd.f32 %v236, %v439
    %441 = vdwg.mxu0
    %v442 = vmax.f32 %v434, 0.0
    %v443 = vmax.f32 %v436, 0.0
    %v444 = vmax.f32 %v438, 0.0
    %v445 = vmax.f32 %v440, 0.0
    %v446 = vpack.c.bf16 %v444, %v442
    %v447 = vpack.c.bf16 %v445, %v443
    %v448 = vld [vmem:[#allocation8] sm:$0xf]
    %v449 = vld [vmem:[#allocation8 + $0x4] sm:$0xf]
    %v450 = vld [vmem:[#allocation8 + $0x8] sm:$0xf]
    %v451 = vld [vmem:[#allocation8 + $0xc] sm:$0xf]
    %v452 = vld [vmem:[#allocation8 + $0x10] sm:$0xf]
    %v453 = vld [vmem:[#allocation8 + $0x14] sm:$0xf]
    %v454 = vld [vmem:[#allocation8 + $0x18] sm:$0xf]
    %v455 = vld [vmem:[#allocation8 + $0x1c] sm:$0xf]
    %v456 = vld [vmem:[#allocation8 + $0x20] sm:$0xf]
    %v457 = vld [vmem:[#allocation8 + $0x24] sm:$0xf]
    %v458 = vld [vmem:[#allocation8 + $0x28] sm:$0xf]
    %v459 = vld [vmem:[#allocation8 + $0x2c] sm:$0xf]
    %v460 = vld [vmem:[#allocation8 + $0x30] sm:$0xf]
    %v461 = vld [vmem:[#allocation8 + $0x34] sm:$0xf]
    %v462 = vld [vmem:[#allocation8 + $0x38] sm:$0xf]
    %v463 = vld [vmem:[#allocation8 + $0x3c] sm:$0xf]
    %v464 = vld [vmem:[#allocation8 + $0x40] sm:$0xf]
    %v465 = vld [vmem:[#allocation8 + $0x44] sm:$0xf]
    %v466 = vld [vmem:[#allocation8 + $0x48] sm:$0xf]
    %v467 = vld [vmem:[#allocation8 + $0x4c] sm:$0xf]
    %v468 = vld [vmem:[#allocation8 + $0x50] sm:$0xf]
    %v469 = vld [vmem:[#allocation8 + $0x54] sm:$0xf]
    %v470 = vld [vmem:[#allocation8 + $0x58] sm:$0xf]
    %v471 = vld [vmem:[#allocation8 + $0x5c] sm:$0xf]
    %v472 = vld [vmem:[#allocation8 + $0x60] sm:$0xf]
    %v473 = vld [vmem:[#allocation8 + $0x64] sm:$0xf]
    %v474 = vld [vmem:[#allocation8 + $0x68] sm:$0xf]
    %v475 = vld [vmem:[#allocation8 + $0x6c] sm:$0xf]
    %v476 = vld [vmem:[#allocation8 + $0x70] sm:$0xf]
    %v477 = vld [vmem:[#allocation8 + $0x74] sm:$0xf]
    %v478 = vld [vmem:[#allocation8 + $0x78] sm:$0xf]
    %v479 = vld [vmem:[#allocation8 + $0x7c] sm:$0xf]
    %v480 = vld [vmem:[%s6] sm:$0x1]
    %v482 = vlaneseq
    %v483 = vshrl.u32 %v482, 7
    %v484 = vsub.s32 0, %v483
    %v485 = vrot.slane %v480, %v484
    %v519 = vunpack.c.l.b16 %v448
    %v520 = vunpack.c.l.b16 %v449
    %v521 = vunpack.c.l.b16 %v450
    %v522 = vunpack.c.l.b16 %v451
    %v523 = vunpack.c.l.b16 %v452
    %v524 = vunpack.c.l.b16 %v453
    %v525 = vunpack.c.l.b16 %v454
    %v526 = vunpack.c.l.b16 %v455
    %v527 = vunpack.c.l.b16 %v456
    %v528 = vunpack.c.l.b16 %v457
    %v529 = vunpack.c.l.b16 %v458
    %v530 = vunpack.c.l.b16 %v459
    %v531 = vunpack.c.l.b16 %v460
    %v532 = vunpack.c.l.b16 %v461
    %v533 = vunpack.c.l.b16 %v462
    %v534 = vunpack.c.l.b16 %v463
    %v535 = vunpack.c.l.b16 %v464
    %v536 = vunpack.c.l.b16 %v465
    %v537 = vunpack.c.l.b16 %v466
    %v538 = vunpack.c.l.b16 %v467
    %v539 = vunpack.c.l.b16 %v468
    %v540 = vunpack.c.l.b16 %v469
    %v541 = vunpack.c.l.b16 %v470
    %v542 = vunpack.c.l.b16 %v471
    %v543 = vunpack.c.l.b16 %v472
    %v544 = vunpack.c.l.b16 %v473
    %v545 = vunpack.c.l.b16 %v474
    %v546 = vunpack.c.l.b16 %v475
    %v547 = vunpack.c.l.b16 %v476
    %v548 = vunpack.c.l.b16 %v477
    %v549 = vunpack.c.l.b16 %v478
    %v550 = vunpack.c.l.b16 %v479
    %v551 = vpack.c.b16 %v520, %v519
    %v552 = vpack.c.b16 %v522, %v521
    %v553 = vpack.c.b16 %v524, %v523
    %v554 = vpack.c.b16 %v526, %v525
    %v555 = vpack.c.b16 %v528, %v527
    %v556 = vpack.c.b16 %v530, %v529
    %v557 = vpack.c.b16 %v532, %v531
    %v558 = vpack.c.b16 %v534, %v533
    %v559 = vpack.c.b16 %v536, %v535
    %v560 = vpack.c.b16 %v538, %v537
    %v561 = vpack.c.b16 %v540, %v539
    %v562 = vpack.c.b16 %v542, %v541
    %v563 = vpack.c.b16 %v544, %v543
    %v564 = vpack.c.b16 %v546, %v545
    %v565 = vpack.c.b16 %v548, %v547
    %v566 = vpack.c.b16 %v550, %v549
    %583 = vmatprep.subr.bf16.mxu0 0
    %584 = vmatpush1.bf16.msra.mxu0 %v558
    %585 = vmatprep.subr.bf16.mxu0 0
    %586 = vmatpush1.bf16.msra.mxu0 %v557
    %587 = vmatprep.subr.bf16.mxu0 0
    %588 = vmatpush1.bf16.msra.mxu0 %v556
    %589 = vmatprep.subr.bf16.mxu0 0
    %590 = vmatpush1.bf16.msra.mxu0 %v555
    %591 = vmatprep.subr.bf16.mxu0 0
    %592 = vmatpush1.bf16.msra.mxu0 %v554
    %593 = vmatprep.subr.bf16.mxu0 0
    %594 = vmatpush1.bf16.msra.mxu0 %v553
    %595 = vmatprep.subr.bf16.mxu0 0
    %596 = vmatpush1.bf16.msra.mxu0 %v552
    %597 = vmatprep.subr.bf16.mxu0 0
    %598 = vmatpush1.bf16.msra.mxu0 %v551
    %599 = vmatprep.subr.bf16.mxu0 0
    %600 = vmatpush2.bf16.msra.mxu0 %v566
    %601 = vmatprep.subr.bf16.mxu0 0
    %602 = vmatpush2.bf16.msra.mxu0 %v565
    %603 = vmatprep.subr.bf16.mxu0 0
    %604 = vmatpush2.bf16.msra.mxu0 %v564
    %605 = vmatprep.subr.bf16.mxu0 0
    %606 = vmatpush2.bf16.msra.mxu0 %v563
    %607 = vmatprep.subr.bf16.mxu0 0
    %608 = vmatpush2.bf16.msra.mxu0 %v562
    %609 = vmatprep.subr.bf16.mxu0 0
    %610 = vmatpush2.bf16.msra.mxu0 %v561
    %611 = vmatprep.subr.bf16.mxu0 0
    %612 = vmatpush2.bf16.msra.mxu0 %v560
    %613 = vmatprep.subr.bf16.mxu0 0
    %614 = vmatpush2.bf16.msra.mxu0 %v559
    %615 = vmatprep.mubr.bf16.mxu0 %v447
    %616 = vmatmul.mubr.bf16.gmra.mxu0 %v446
    %v617 = vpop.f32.mrf.mxu0
    %v618 = vadd.f32 %v485, %v617
    %v619 = vpop.f32.mrf.mxu0
    %v620 = vpop.f32.mrf.mxu0
    %v621 = vadd.f32 %v485, %v620
    %v622 = vpop.f32.mrf.mxu0
    %623 = vdwg.mxu0
    %v624 = vpack.c.bf16 %v621, %v618
    %v626 = vunpack.c.l.b16 %v624
    %v627 = vunpack.c.h.b16 %v624
    %v628 = vpack.c.b16 %v626, %v626
    %v629 = vpack.c.b16 %v627, %v627
    %632 = vst [vmem:[#allocation10] sm:$0xf] %v628
    %633 = vst [vmem:[#allocation10 + $0x4] sm:$0xf] %v629
    // Predicated region
    $region46: #{tpu_custom_call.1} parent=1 // pred_check
      _
    $region47: #{tpu_custom_call.1} parent=1 // pred_check_branch
      %635 = sbr.rel (0) target = $region49
    $region48: #{tpu_custom_call.1} parent=1 // pred_region
      %s637 = ssub.s32 128, 128
      %638 = vsyncadd [#allocation4], %s637
      %s639 = sshll.u32 [#allocation10], 4
      %s640 = int_to_ptr.vmem [resolvable:$true] %s639
      %645 = dma.vmem_to_hbm [thread:$0]  %s640, 128, %s7, [#allocation4], 64, 64, 4
    $region49: #{tpu_custom_call.1} parent=1 // pred_fallthru
      _
    // Predicated region
    $region50: #{tpu_custom_call.1} parent=1 // pred_check
      _
    $region51: #{tpu_custom_call.1} parent=1 // pred_check_branch
      %647 = sbr.rel (0) target = $region53
    $region52: #{tpu_custom_call.1} parent=1 // pred_region
      %648 = dma.done [#allocation4], 128
    $region53: #{tpu_custom_call.1} parent=1 // pred_fallthru
      _
    %649 = vsyncpa [#allocation3], 1
    %650 = vsyncpa [#allocation6], 1
    %651 = vsyncpa [#allocation9], 1
    %652 = vsyncpa [#allocation4], 1

</llo_original>
